<compile_context>
chip_gen: v5e
topology: v5e:2x2
jax: 0.10.0
libtpu: 0.0.40
codegen_flags: <defaults>
</compile_context>

<pallas_src>
import jax
import jax.numpy as jnp
from jax.experimental import pallas as pl
from jax.experimental.pallas import tpu as pltpu


def _sigmoid(z):
    return 1.0 / (1.0 + jnp.exp(-z))


def _leaky_relu(z, slope=0.2):
    return jnp.where(z >= 0, z, slope * z)


def _stgnn_kernel(x_ref, wt_ref, asrc_ref, adst_ref, gsrc_ref, gdst_ref,
                  rep_ref, xt_ref, wc_ref, bc_ref, wgs_ref, wgt_ref, bg_ref,
                  wo_ref, bo_ref, hs_ref, y_ref):
    f32 = jnp.float32
    bf16 = jnp.bfloat16

    # ---------------- ManualGATLayer ----------------
    # Node-level transform + attention projections (no per-edge x_dst gather).
    x_trans = jnp.dot(x_ref[...], wt_ref[...], preferred_element_type=f32)      # [N, HF]
    natt_src = jnp.dot(x_trans, asrc_ref[...], preferred_element_type=f32)      # [N, h]
    natt_dst = jnp.dot(x_trans, adst_ref[...], preferred_element_type=f32)      # [N, h]

    gsrc = gsrc_ref[...]                     # [E, N] bf16 one-hot (exact 0/1)
    gdst = gdst_ref[...]                     # [E, N] bf16 one-hot (exact 0/1)

    # Edge gathers as MXU matmuls: bf16 inputs, f32 accumulation.
    x_src = jnp.dot(gsrc, x_trans.astype(bf16), preferred_element_type=f32)     # [E, HF]
    attn_src = jnp.dot(gsrc, natt_src.astype(bf16), preferred_element_type=f32) # [E, h]
    attn_dst = jnp.dot(gdst, natt_dst.astype(bf16), preferred_element_type=f32) # [E, h]

    scores = _leaky_relu(attn_src + attn_dst)                                   # [E, h]
    # softmax over the edge axis (dim=0 in the PyTorch module), per head.
    m = jnp.max(scores, axis=0, keepdims=True)
    e = jnp.exp(scores - m)
    s = jnp.sum(e, axis=0, keepdims=True)
    attn_w = e * pl.reciprocal(s, approx=True)                                  # [E, h]
    # dropout on attn_w: eval-mode identity.

    # Expand per-head weights to per-feature columns (tiny MXU matmul).
    w_exp = jnp.dot(attn_w, rep_ref[...], preferred_element_type=f32)           # [E, HF]
    weighted = (x_src * w_exp).astype(bf16)                                     # [E, HF]

    # scatter_add: contract the edge axis of gdst with the edge axis of
    # `weighted` (transposed-LHS matmul stays on the MXU, no XLU transpose).
    h_space = jax.lax.dot_general(
        gdst, weighted, dimension_numbers=(((0,), (0,)), ((), ())),
        preferred_element_type=f32)                                             # [N, HF]
    hs_ref[...] = h_space

    # ---------------- TCN (dilated Conv1d as im2col matmul) ----------------
    h_time = jnp.dot(xt_ref[...], wc_ref[...], preferred_element_type=f32) + bc_ref[...]
    h_time = _leaky_relu(h_time)                                                # [N, 64]

    # ---------------- FusionModule + output head ----------------
    g_logit = (jnp.dot(h_space, wgs_ref[...], preferred_element_type=f32)
               + jnp.dot(h_time, wgt_ref[...], preferred_element_type=f32)
               + bg_ref[...])                                                   # [N, 1]
    g = _sigmoid(g_logit)
    h_fused = g * h_space + (1.0 - g) * h_time                                  # [N, 64]
    y = jnp.dot(h_fused, wo_ref[...], preferred_element_type=f32) + bo_ref[...]
    y_ref[...] = _sigmoid(y)                                                    # [N, 1]


def stgnn_forward(params, x_spatial, edge_index, x_temporal,
                  heads=4, out_features=16):
    """x_spatial: [N, 70] f32, edge_index: [2, E] int32, x_temporal: [1, N, 24] f32.
    Returns (h_space [N, heads*out_features], out [N, 1])."""
    N, d_in = x_spatial.shape
    E = edge_index.shape[1]
    h, F = heads, out_features
    HF = h * F
    hidden, c_in, K = params["Wc"].shape
    dil = 2
    pad = (K - 1) * dil // 2

    src, dst = edge_index[0], edge_index[1]
    # one-hot gather/scatter matrices: 0/1 exact in bf16, half the VMEM.
    gsrc = jax.nn.one_hot(src, N, dtype=jnp.bfloat16)                 # [E, N]
    gdst = jax.nn.one_hot(dst, N, dtype=jnp.bfloat16)                 # [E, N]

    w_t = params["W"].T.astype(jnp.float32)                           # [Din, HF]

    def block_diag(a):  # [1, h, F] -> [HF, h], blk[head*F+f, head] = a[0,head,f]
        a2 = a.reshape(h, F).astype(jnp.float32)
        eye = jnp.eye(h, dtype=jnp.float32)
        return (a2[:, :, None] * eye[:, None, :]).reshape(HF, h)

    asrc_blk = block_diag(params["a_src"])                            # [HF, h]
    adst_blk = block_diag(params["a_dst"])                            # [HF, h]
    rep = jnp.kron(jnp.eye(h, dtype=jnp.float32),
                   jnp.ones((1, F), dtype=jnp.float32))               # [h, HF]

    # im2col for Conv1d(k=3, dilation=2, padding=2): out[t] uses x[t-2], x[t], x[t+2].
    xt = x_temporal[0].astype(jnp.float32)                            # [T, Cin], T == N
    def shift_rows(a, s):  # row t -> a[t - s], zero-padded
        if s > 0:
            return jnp.concatenate([jnp.zeros((s, a.shape[1]), a.dtype), a[:-s]], axis=0)
        if s < 0:
            return jnp.concatenate([a[-s:], jnp.zeros((-s, a.shape[1]), a.dtype)], axis=0)
        return a
    xt_unf = jnp.concatenate([shift_rows(xt, pad - k * dil) for k in range(K)],
                             axis=1)                                  # [T, K*Cin]
    w_conv = jnp.transpose(params["Wc"], (2, 1, 0)).reshape(K * c_in, hidden)
    b_conv = params["bc"].reshape(1, hidden).astype(jnp.float32)

    wg = params["Wg"].astype(jnp.float32)                             # [1, 2*hidden]
    wg_s = wg[:, :hidden].T                                           # [hidden, 1]
    wg_t = wg[:, hidden:].T                                           # [hidden, 1]
    b_g = params["bg"].reshape(1, 1).astype(jnp.float32)
    w_o = params["Wo"].T.astype(jnp.float32)                          # [hidden, 1]
    b_o = params["bo"].reshape(1, 1).astype(jnp.float32)

    flops = int(2 * (N * d_in * HF + 2 * N * HF * h + E * N * HF + 2 * E * N * h
                     + E * h * HF + E * N * HF + N * K * c_in * hidden
                     + 3 * N * hidden))
    transcendentals = int(E * h + 2 * N + h)
    bytes_accessed = int(4 * (x_spatial.size + w_t.size + xt_unf.size
                              + w_conv.size + N * HF + N)
                         + 2 * (gsrc.size + gdst.size))
    cost = pl.CostEstimate(flops=flops, transcendentals=transcendentals,
                           bytes_accessed=bytes_accessed)

    vmem = pl.BlockSpec(memory_space=pltpu.MemorySpace.VMEM)
    h_space, out = pl.pallas_call(
        _stgnn_kernel,
        out_shape=(jax.ShapeDtypeStruct((N, HF), jnp.float32),
                   jax.ShapeDtypeStruct((N, 1), jnp.float32)),
        in_specs=[vmem] * 15,
        out_specs=(vmem, vmem),
        cost_estimate=cost,
    )(x_spatial.astype(jnp.float32), w_t, asrc_blk, adst_blk, gsrc, gdst, rep,
      xt_unf, w_conv, b_conv, wg_s, wg_t, b_g, w_o, b_o)
    return h_space, out


def _reference(params, x_spatial, edge_index, x_temporal,
               heads=4, out_features=16):
    """Pure-JAX f32 mirror of the PyTorch STGNN forward (eval-mode dropout)."""
    h, F = heads, out_features
    N = x_spatial.shape[0]
    # ManualGATLayer
    x_trans = (x_spatial @ params["W"].T).reshape(N, h, F)
    src, dst = edge_index[0], edge_index[1]
    x_src = x_trans[src]
    x_dst = x_trans[dst]
    attn_src = (x_src * params["a_src"]).sum(-1)
    attn_dst = (x_dst * params["a_dst"]).sum(-1)
    scores = attn_src + attn_dst
    scores = jnp.where(scores >= 0, scores, 0.2 * scores)
    attn_w = jax.nn.softmax(scores, axis=0)
    weighted = x_src * attn_w[:, :, None]
    h_space = jnp.zeros((N, h, F), jnp.float32).at[dst].add(weighted).reshape(N, h * F)
    # TCN (independent conv path: lax.conv_general_dilated)
    xt = jnp.transpose(x_temporal, (0, 2, 1))                         # [1, Cin, T]
    y = jax.lax.conv_general_dilated(
        xt, params["Wc"], window_strides=(1,), padding=((2, 2),),
        rhs_dilation=(2,), dimension_numbers=("NCH", "OIH", "NCH"))
    y = y + params["bc"][None, :, None]
    h_time = jnp.transpose(y, (0, 2, 1))[0]                           # [T, hidden]
    h_time = jnp.where(h_time >= 0, h_time, 0.2 * h_time)
    # Fusion + output head
    combined = jnp.concatenate([h_space, h_time], axis=-1)
    g = jax.nn.sigmoid(combined @ params["Wg"].T + params["bg"])
    h_fused = g * h_space + (1.0 - g) * h_time
    out = jax.nn.sigmoid(h_fused @ params["Wo"].T + params["bo"])
    return h_space, out


if __name__ == "__main__":
    key = jax.random.PRNGKey(0)
    ks = jax.random.split(key, 12)

    N = 16             # nodes == temporal length (batch 1)
    E = 48             # edges
    in_features = 70   # per STGNN spec
    out_features = 16
    heads = 4
    HF = heads * out_features          # 64
    c_in, hidden, K = 24, 64, 3        # TCN per spec

    def xavier(k, shape, fan_in, fan_out):
        bound = (6.0 / (fan_in + fan_out)) ** 0.5
        return jax.random.uniform(k, shape, jnp.float32, -bound, bound)

    x_spatial = jax.random.normal(ks[0], (N, in_features), jnp.float32)
    edge_index = jax.random.randint(ks[1], (2, E), 0, N, dtype=jnp.int32)
    x_temporal = jax.random.normal(ks[2], (1, N, c_in), jnp.float32)

    params = {
        "W": xavier(ks[3], (HF, in_features), in_features, HF),
        "a_src": xavier(ks[4], (1, heads, out_features), HF, out_features),
        "a_dst": xavier(ks[5], (1, heads, out_features), HF, out_features),
        "Wc": xavier(ks[6], (hidden, c_in, K), c_in * K, hidden),
        "bc": jax.random.uniform(ks[7], (hidden,), jnp.float32, -0.1, 0.1),
        "Wg": xavier(ks[8], (1, 2 * hidden), 2 * hidden, 1),
        "bg": jax.random.uniform(ks[9], (1,), jnp.float32, -0.1, 0.1),
        "Wo": xavier(ks[10], (1, hidden), hidden, 1),
        "bo": jax.random.uniform(ks[11], (1,), jnp.float32, -0.1, 0.1),
    }

    h_space, out = jax.jit(stgnn_forward)(params, x_spatial, edge_index, x_temporal)
    h_space = jax.block_until_ready(h_space)
    out = jax.block_until_ready(out)

    ref_h_space, ref_out = _reference(params, x_spatial, edge_index, x_temporal)

    assert out.shape == (N, 1)
    assert bool(jnp.all(jnp.isfinite(out)))
    # bf16 gather/scatter path -> compare against the pure-f32 reference with a
    # bf16-level tolerance.
    assert jnp.allclose(h_space, ref_h_space, atol=3e-2, rtol=3e-2), "GAT mismatch"
    assert jnp.allclose(out, ref_out, atol=3e-2, rtol=3e-2), "STGNN output mismatch"

    print("KERNEL_OK")
</pallas_src>

<mosaic_0001>
module attributes {stable_mosaic.version = 11 : i64} {
  func.func @_stgnn_kernel(%arg0: memref<16x70xf32, #tpu.memory_space<vmem>>, %arg1: memref<70x64xf32, #tpu.memory_space<vmem>>, %arg2: memref<64x4xf32, #tpu.memory_space<vmem>>, %arg3: memref<64x4xf32, #tpu.memory_space<vmem>>, %arg4: memref<48x16xbf16, #tpu.memory_space<vmem>>, %arg5: memref<48x16xbf16, #tpu.memory_space<vmem>>, %arg6: memref<4x64xf32, #tpu.memory_space<vmem>>, %arg7: memref<16x72xf32, #tpu.memory_space<vmem>>, %arg8: memref<72x64xf32, #tpu.memory_space<vmem>>, %arg9: memref<1x64xf32, #tpu.memory_space<vmem>>, %arg10: memref<64x1xf32, #tpu.memory_space<vmem>>, %arg11: memref<64x1xf32, #tpu.memory_space<vmem>>, %arg12: memref<1x1xf32, #tpu.memory_space<vmem>>, %arg13: memref<64x1xf32, #tpu.memory_space<vmem>>, %arg14: memref<1x1xf32, #tpu.memory_space<vmem>>, %arg15: memref<16x64xf32, #tpu.memory_space<vmem>>, %arg16: memref<16x1xf32, #tpu.memory_space<vmem>>) attributes {dimension_semantics = [], scalar_prefetch = 0 : i64, scratch_operands = 0 : i64, tpu.core_type = #tpu.core_type<tc>} {
    %c0 = arith.constant 0 : index
    %c0_0 = arith.constant 0 : index
    %0 = vector.load %arg0[%c0, %c0_0] : memref<16x70xf32, #tpu.memory_space<vmem>>, vector<16x70xf32>
    %c0_1 = arith.constant 0 : index
    %c0_2 = arith.constant 0 : index
    %1 = vector.load %arg1[%c0_1, %c0_2] : memref<70x64xf32, #tpu.memory_space<vmem>>, vector<70x64xf32>
    %cst = arith.constant dense<0.000000e+00> : vector<16x64xf32>
    %2 = tpu.matmul %0, %1, %cst {dimension_numbers = #tpu.dot_dimension_numbers<[1], [0], [0], [1], [0, 0, 1, 1], [], []>} : vector<16x70xf32>, vector<70x64xf32>, vector<16x64xf32> -> vector<16x64xf32>
    %c0_3 = arith.constant 0 : index
    %c0_4 = arith.constant 0 : index
    %3 = vector.load %arg2[%c0_3, %c0_4] : memref<64x4xf32, #tpu.memory_space<vmem>>, vector<64x4xf32>
    %cst_5 = arith.constant dense<0.000000e+00> : vector<16x4xf32>
    %4 = tpu.matmul %2, %3, %cst_5 {dimension_numbers = #tpu.dot_dimension_numbers<[1], [0], [0], [1], [0, 0, 1, 1], [], []>} : vector<16x64xf32>, vector<64x4xf32>, vector<16x4xf32> -> vector<16x4xf32>
    %c0_6 = arith.constant 0 : index
    %c0_7 = arith.constant 0 : index
    %5 = vector.load %arg3[%c0_6, %c0_7] : memref<64x4xf32, #tpu.memory_space<vmem>>, vector<64x4xf32>
    %cst_8 = arith.constant dense<0.000000e+00> : vector<16x4xf32>
    %6 = tpu.matmul %2, %5, %cst_8 {dimension_numbers = #tpu.dot_dimension_numbers<[1], [0], [0], [1], [0, 0, 1, 1], [], []>} : vector<16x64xf32>, vector<64x4xf32>, vector<16x4xf32> -> vector<16x4xf32>
    %c0_9 = arith.constant 0 : index
    %c0_10 = arith.constant 0 : index
    %7 = vector.load %arg4[%c0_9, %c0_10] : memref<48x16xbf16, #tpu.memory_space<vmem>>, vector<48x16xbf16>
    %c0_11 = arith.constant 0 : index
    %c0_12 = arith.constant 0 : index
    %8 = vector.load %arg5[%c0_11, %c0_12] : memref<48x16xbf16, #tpu.memory_space<vmem>>, vector<48x16xbf16>
    %9 = arith.truncf %2 : vector<16x64xf32> to vector<16x64xbf16>
    %cst_13 = arith.constant dense<0.000000e+00> : vector<48x64xf32>
    %10 = tpu.matmul %7, %9, %cst_13 {dimension_numbers = #tpu.dot_dimension_numbers<[1], [0], [0], [1], [0, 0, 1, 1], [], []>} : vector<48x16xbf16>, vector<16x64xbf16>, vector<48x64xf32> -> vector<48x64xf32>
    %11 = arith.truncf %4 : vector<16x4xf32> to vector<16x4xbf16>
    %cst_14 = arith.constant dense<0.000000e+00> : vector<48x4xf32>
    %12 = tpu.matmul %7, %11, %cst_14 {dimension_numbers = #tpu.dot_dimension_numbers<[1], [0], [0], [1], [0, 0, 1, 1], [], []>} : vector<48x16xbf16>, vector<16x4xbf16>, vector<48x4xf32> -> vector<48x4xf32>
    %13 = arith.truncf %6 : vector<16x4xf32> to vector<16x4xbf16>
    %cst_15 = arith.constant dense<0.000000e+00> : vector<48x4xf32>
    %14 = tpu.matmul %8, %13, %cst_15 {dimension_numbers = #tpu.dot_dimension_numbers<[1], [0], [0], [1], [0, 0, 1, 1], [], []>} : vector<48x16xbf16>, vector<16x4xbf16>, vector<48x4xf32> -> vector<48x4xf32>
    %15 = arith.addf %12, %14 : vector<48x4xf32>
    %cst_16 = arith.constant 0.000000e+00 : f32
    %16 = vector.broadcast %cst_16 : f32 to vector<48x4xf32>
    %17 = arith.cmpf oge, %15, %16 : vector<48x4xf32>
    %cst_17 = arith.constant 2.000000e-01 : f32
    %18 = vector.broadcast %cst_17 : f32 to vector<48x4xf32>
    %19 = arith.mulf %18, %15 : vector<48x4xf32>
    %20 = arith.select %17, %15, %19 : vector<48x4xi1>, vector<48x4xf32>
    %cst_18 = arith.constant dense<0xFF800000> : vector<4xf32>
    %21 = vector.multi_reduction <maximumf>, %20, %cst_18 [0] : vector<48x4xf32> to vector<4xf32>
    %22 = vector.shape_cast %21 : vector<4xf32> to vector<1x4xf32>
    %23 = vector.broadcast %22 : vector<1x4xf32> to vector<48x4xf32>
    %24 = arith.subf %20, %23 : vector<48x4xf32>
    %25 = math.exp %24 : vector<48x4xf32>
    %cst_19 = arith.constant dense<0.000000e+00> : vector<4xf32>
    %26 = vector.multi_reduction <add>, %25, %cst_19 [0] : vector<48x4xf32> to vector<4xf32>
    %27 = vector.shape_cast %26 : vector<4xf32> to vector<1x4xf32>
    %28 = tpu.reciprocal %27 {approx = true} : vector<1x4xf32> -> vector<1x4xf32>
    %29 = vector.broadcast %28 : vector<1x4xf32> to vector<48x4xf32>
    %30 = arith.mulf %25, %29 : vector<48x4xf32>
    %c0_20 = arith.constant 0 : index
    %c0_21 = arith.constant 0 : index
    %31 = vector.load %arg6[%c0_20, %c0_21] : memref<4x64xf32, #tpu.memory_space<vmem>>, vector<4x64xf32>
    %cst_22 = arith.constant dense<0.000000e+00> : vector<48x64xf32>
    %32 = tpu.matmul %30, %31, %cst_22 {dimension_numbers = #tpu.dot_dimension_numbers<[1], [0], [0], [1], [0, 0, 1, 1], [], []>} : vector<48x4xf32>, vector<4x64xf32>, vector<48x64xf32> -> vector<48x64xf32>
    %33 = arith.mulf %10, %32 : vector<48x64xf32>
    %34 = arith.truncf %33 : vector<48x64xf32> to vector<48x64xbf16>
    %cst_23 = arith.constant dense<0.000000e+00> : vector<16x64xf32>
    %35 = tpu.matmul %8, %34, %cst_23 {dimension_numbers = #tpu.dot_dimension_numbers<[0], [0], [1], [1], [0, 1, 1, 1], [], []>} : vector<48x16xbf16>, vector<48x64xbf16>, vector<16x64xf32> -> vector<16x64xf32>
    %c0_24 = arith.constant 0 : index
    %c0_25 = arith.constant 0 : index
    %36 = vector.load %arg15[%c0_24, %c0_25] : memref<16x64xf32, #tpu.memory_space<vmem>>, vector<16x64xf32>
    tpu.vector_store %arg15[%c0_24, %c0_25], %35 {strides = array<i32>} : memref<16x64xf32, #tpu.memory_space<vmem>>, vector<16x64xf32>,
    %c0_26 = arith.constant 0 : index
    %c0_27 = arith.constant 0 : index
    %37 = vector.load %arg7[%c0_26, %c0_27] : memref<16x72xf32, #tpu.memory_space<vmem>>, vector<16x72xf32>
    %c0_28 = arith.constant 0 : index
    %c0_29 = arith.constant 0 : index
    %38 = vector.load %arg8[%c0_28, %c0_29] : memref<72x64xf32, #tpu.memory_space<vmem>>, vector<72x64xf32>
    %cst_30 = arith.constant dense<0.000000e+00> : vector<16x64xf32>
    %39 = tpu.matmul %37, %38, %cst_30 {dimension_numbers = #tpu.dot_dimension_numbers<[1], [0], [0], [1], [0, 0, 1, 1], [], []>} : vector<16x72xf32>, vector<72x64xf32>, vector<16x64xf32> -> vector<16x64xf32>
    %c0_31 = arith.constant 0 : index
    %c0_32 = arith.constant 0 : index
    %40 = vector.load %arg9[%c0_31, %c0_32] : memref<1x64xf32, #tpu.memory_space<vmem>>, vector<1x64xf32>
    %41 = vector.broadcast %40 : vector<1x64xf32> to vector<16x64xf32>
    %42 = arith.addf %39, %41 : vector<16x64xf32>
    %cst_33 = arith.constant 0.000000e+00 : f32
    %43 = vector.broadcast %cst_33 : f32 to vector<16x64xf32>
    %44 = arith.cmpf oge, %42, %43 : vector<16x64xf32>
    %cst_34 = arith.constant 2.000000e-01 : f32
    %45 = vector.broadcast %cst_34 : f32 to vector<16x64xf32>
    %46 = arith.mulf %45, %42 : vector<16x64xf32>
    %47 = arith.select %44, %42, %46 : vector<16x64xi1>, vector<16x64xf32>
    %c0_35 = arith.constant 0 : index
    %c0_36 = arith.constant 0 : index
    %48 = vector.load %arg10[%c0_35, %c0_36] : memref<64x1xf32, #tpu.memory_space<vmem>>, vector<64x1xf32>
    %cst_37 = arith.constant dense<0.000000e+00> : vector<16x1xf32>
    %49 = tpu.matmul %35, %48, %cst_37 {dimension_numbers = #tpu.dot_dimension_numbers<[1], [0], [0], [1], [0, 0, 1, 1], [], []>} : vector<16x64xf32>, vector<64x1xf32>, vector<16x1xf32> -> vector<16x1xf32>
    %c0_38 = arith.constant 0 : index
    %c0_39 = arith.constant 0 : index
    %50 = vector.load %arg11[%c0_38, %c0_39] : memref<64x1xf32, #tpu.memory_space<vmem>>, vector<64x1xf32>
    %cst_40 = arith.constant dense<0.000000e+00> : vector<16x1xf32>
    %51 = tpu.matmul %47, %50, %cst_40 {dimension_numbers = #tpu.dot_dimension_numbers<[1], [0], [0], [1], [0, 0, 1, 1], [], []>} : vector<16x64xf32>, vector<64x1xf32>, vector<16x1xf32> -> vector<16x1xf32>
    %52 = arith.addf %49, %51 : vector<16x1xf32>
    %c0_41 = arith.constant 0 : index
    %c0_42 = arith.constant 0 : index
    %53 = vector.load %arg12[%c0_41, %c0_42] : memref<1x1xf32, #tpu.memory_space<vmem>>, vector<1x1xf32>
    %54 = vector.broadcast %53 : vector<1x1xf32> to vector<16x1xf32>
    %55 = arith.addf %52, %54 : vector<16x1xf32>
    %cst_43 = arith.constant 0.000000e+00 : f32
    %56 = vector.broadcast %cst_43 : f32 to vector<16x1xf32>
    %57 = arith.subf %56, %55 : vector<16x1xf32>
    %58 = math.exp %57 : vector<16x1xf32>
    %cst_44 = arith.constant 1.000000e+00 : f32
    %59 = vector.broadcast %cst_44 : f32 to vector<16x1xf32>
    %60 = arith.addf %59, %58 : vector<16x1xf32>
    %cst_45 = arith.constant 1.000000e+00 : f32
    %61 = vector.broadcast %cst_45 : f32 to vector<16x1xf32>
    %62 = arith.divf %61, %60 : vector<16x1xf32>
    %63 = vector.broadcast %62 : vector<16x1xf32> to vector<16x64xf32>
    %64 = arith.mulf %63, %35 : vector<16x64xf32>
    %cst_46 = arith.constant 1.000000e+00 : f32
    %65 = vector.broadcast %cst_46 : f32 to vector<16x1xf32>
    %66 = arith.subf %65, %62 : vector<16x1xf32>
    %67 = vector.broadcast %66 : vector<16x1xf32> to vector<16x64xf32>
    %68 = arith.mulf %67, %47 : vector<16x64xf32>
    %69 = arith.addf %64, %68 : vector<16x64xf32>
    %c0_47 = arith.constant 0 : index
    %c0_48 = arith.constant 0 : index
    %70 = vector.load %arg13[%c0_47, %c0_48] : memref<64x1xf32, #tpu.memory_space<vmem>>, vector<64x1xf32>
    %cst_49 = arith.constant dense<0.000000e+00> : vector<16x1xf32>
    %71 = tpu.matmul %69, %70, %cst_49 {dimension_numbers = #tpu.dot_dimension_numbers<[1], [0], [0], [1], [0, 0, 1, 1], [], []>} : vector<16x64xf32>, vector<64x1xf32>, vector<16x1xf32> -> vector<16x1xf32>
    %c0_50 = arith.constant 0 : index
    %c0_51 = arith.constant 0 : index
    %72 = vector.load %arg14[%c0_50, %c0_51] : memref<1x1xf32, #tpu.memory_space<vmem>>, vector<1x1xf32>
    %73 = vector.broadcast %72 : vector<1x1xf32> to vector<16x1xf32>
    %74 = arith.addf %71, %73 : vector<16x1xf32>
    %cst_52 = arith.constant 0.000000e+00 : f32
    %75 = vector.broadcast %cst_52 : f32 to vector<16x1xf32>
    %76 = arith.subf %75, %74 : vector<16x1xf32>
    %77 = math.exp %76 : vector<16x1xf32>
    %cst_53 = arith.constant 1.000000e+00 : f32
    %78 = vector.broadcast %cst_53 : f32 to vector<16x1xf32>
    %79 = arith.addf %78, %77 : vector<16x1xf32>
    %cst_54 = arith.constant 1.000000e+00 : f32
    %80 = vector.broadcast %cst_54 : f32 to vector<16x1xf32>
    %81 = arith.divf %80, %79 : vector<16x1xf32>
    %c0_55 = arith.constant 0 : index
    %c0_56 = arith.constant 0 : index
    %82 = vector.load %arg16[%c0_55, %c0_56] : memref<16x1xf32, #tpu.memory_space<vmem>>, vector<16x1xf32>
    tpu.vector_store %arg16[%c0_55, %c0_56], %81 {strides = array<i32>} : memref<16x1xf32, #tpu.memory_space<vmem>>, vector<16x1xf32>,
    return
  }
}

</mosaic_0001>

<llo_original>
// kernel: stgnn_forward.1
$region0: #{stgnn_forward.1}
  #allocation0 [shape = 'u32[]', space=smem, size = 0x4, offset = 0x4, fixed_abs, tag = 'smem constant byte address 0x4 - core index']
  #allocation1 [shape = 'u32[72,128]{1,0:T(1,128)}', space=vmem, size = 0x9000, scoped, tag = 'internal scratch']
  #allocation2 [shape = 'f32[1,1]{1,0:T(1,128)S(1)}', space=vmem, size = 0x200, scoped, tag = 'scoped memory for stgnn_forward.1']
  #allocation3 [shape = 'f32[1,1]{1,0:T(1,128)S(1)}', space=vmem, size = 0x200, scoped, tag = 'scoped memory for stgnn_forward.1']
  %s0 = inlined_call_operand.vmem [shape: f32[16,70], index: 0, kind: input, shape index: {}]
  %s1 = inlined_call_operand.vmem [shape: f32[70,64], index: 1, kind: input, shape index: {}]
  %s2 = inlined_call_operand.vmem [shape: f32[64,4], index: 2, kind: input, shape index: {}]
  %s3 = inlined_call_operand.vmem [shape: f32[64,4], index: 3, kind: input, shape index: {}]
  %s4 = inlined_call_operand.vmem [shape: bf16[48,16], index: 4, kind: input, shape index: {}]
  %s5 = inlined_call_operand.vmem [shape: bf16[48,16], index: 5, kind: input, shape index: {}]
  %s6 = inlined_call_operand.vmem [shape: f32[4,64], index: 6, kind: input, shape index: {}]
  %s7 = inlined_call_operand.vmem [shape: f32[16,72], index: 7, kind: input, shape index: {}]
  %s8 = inlined_call_operand.vmem [shape: f32[72,64], index: 8, kind: input, shape index: {}]
  %s9 = inlined_call_operand.vmem [shape: f32[1,64], index: 9, kind: input, shape index: {}]
  %s10 = inlined_call_operand.vmem [shape: f32[64,1], index: 10, kind: input, shape index: {}]
  %s11 = inlined_call_operand.vmem [shape: f32[64,1], index: 11, kind: input, shape index: {}]
  %s12 = inlined_call_operand.<no memory space> [shape: f32[1,1], index: 12, kind: input, shape index: {}]
  %s13 = inlined_call_operand.vmem [shape: f32[64,1], index: 13, kind: input, shape index: {}]
  %s14 = inlined_call_operand.<no memory space> [shape: f32[1,1], index: 14, kind: input, shape index: {}]
  %s15 = inlined_call_operand.hbm [shape: f32[16,64], index: 15, kind: output, shape index: {0}]
  %s16 = inlined_call_operand.vmem [shape: f32[16,1], index: 16, kind: output, shape index: {1}]
  %17 = xla_tuple %s15, %s16
  %s18 = sld [smem:[#allocation0]]
  $region78: #{stgnn_forward.1} parent=0
    _
  %s20 = ssub.s32 1, %s18
  %s21 = scalar_select 0, %s20, %s18
  %v22 = vstv %s12
  %23 = vst [vmem:[#allocation2] sm:$0x1] %v22
  %v24 = vstv %s14
  %25 = vst [vmem:[#allocation3] sm:$0x1] %v24
  $region1: #{stgnn_forward.1} parent=0
    #allocation4 [shape = 'u8[8192]{0}', space=vmem, size = 0x2000, scoped, tag = 'output window, operand 0, single buffered']
    #allocation5 [shape = 's32[1]{0}', space=sflag, size = 0x4, scoped, tag = 'scoped memory for stgnn_forward.1']
    %26 = vsyncpa [#allocation5], 0
    // Predicated region
    $region2: #{stgnn_forward.1} parent=1 // pred_check
      _
    $region3: #{stgnn_forward.1} parent=1 // pred_check_branch
      %28 = sbr.rel (0) target = $region5
    $region4: #{stgnn_forward.1} parent=1 // pred_region
      _
    $region5: #{stgnn_forward.1} parent=1 // pred_fallthru
      _
    // Predicated region
    $region6: #{stgnn_forward.1} parent=1 // pred_check
      _
    $region7: #{stgnn_forward.1} parent=1 // pred_check_branch
      %30 = sbr.rel (0) target = $region9
    $region8: #{stgnn_forward.1} parent=1 // pred_region
      _
    $region9: #{stgnn_forward.1} parent=1 // pred_fallthru
      _
    // Predicated region
    $region10: #{stgnn_forward.1} parent=1 // pred_check
      _
    $region11: #{stgnn_forward.1} parent=1 // pred_check_branch
      %32 = sbr.rel (0) target = $region13
    $region12: #{stgnn_forward.1} parent=1 // pred_region
      _
    $region13: #{stgnn_forward.1} parent=1 // pred_fallthru
      _
    // Predicated region
    $region14: #{stgnn_forward.1} parent=1 // pred_check
      _
    $region15: #{stgnn_forward.1} parent=1 // pred_check_branch
      %34 = sbr.rel (0) target = $region17
    $region16: #{stgnn_forward.1} parent=1 // pred_region
      _
    $region17: #{stgnn_forward.1} parent=1 // pred_fallthru
      _
    // Predicated region
    $region18: #{stgnn_forward.1} parent=1 // pred_check
      _
    $region19: #{stgnn_forward.1} parent=1 // pred_check_branch
      %36 = sbr.rel (0) target = $region21
    $region20: #{stgnn_forward.1} parent=1 // pred_region
      _
    $region21: #{stgnn_forward.1} parent=1 // pred_fallthru
      _
    // Predicated region
    $region22: #{stgnn_forward.1} parent=1 // pred_check
      _
    $region23: #{stgnn_forward.1} parent=1 // pred_check_branch
      %38 = sbr.rel (0) target = $region25
    $region24: #{stgnn_forward.1} parent=1 // pred_region
      _
    $region25: #{stgnn_forward.1} parent=1 // pred_fallthru
      _
    // Predicated region
    $region26: #{stgnn_forward.1} parent=1 // pred_check
      _
    $region27: #{stgnn_forward.1} parent=1 // pred_check_branch
      %40 = sbr.rel (0) target = $region29
    $region28: #{stgnn_forward.1} parent=1 // pred_region
      _
    $region29: #{stgnn_forward.1} parent=1 // pred_fallthru
      _
    // Predicated region
    $region30: #{stgnn_forward.1} parent=1 // pred_check
      _
    $region31: #{stgnn_forward.1} parent=1 // pred_check_branch
      %42 = sbr.rel (0) target = $region33
    $region32: #{stgnn_forward.1} parent=1 // pred_region
      _
    $region33: #{stgnn_forward.1} parent=1 // pred_fallthru
      _
    // Predicated region
    $region34: #{stgnn_forward.1} parent=1 // pred_check
      _
    $region35: #{stgnn_forward.1} parent=1 // pred_check_branch
      %44 = sbr.rel (0) target = $region37
    $region36: #{stgnn_forward.1} parent=1 // pred_region
      _
    $region37: #{stgnn_forward.1} parent=1 // pred_fallthru
      _
    // Predicated region
    $region38: #{stgnn_forward.1} parent=1 // pred_check
      _
    $region39: #{stgnn_forward.1} parent=1 // pred_check_branch
      %46 = sbr.rel (0) target = $region41
    $region40: #{stgnn_forward.1} parent=1 // pred_region
      _
    $region41: #{stgnn_forward.1} parent=1 // pred_fallthru
      _
    // Predicated region
    $region42: #{stgnn_forward.1} parent=1 // pred_check
      _
    $region43: #{stgnn_forward.1} parent=1 // pred_check_branch
      %48 = sbr.rel (0) target = $region45
    $region44: #{stgnn_forward.1} parent=1 // pred_region
      _
    $region45: #{stgnn_forward.1} parent=1 // pred_fallthru
      _
    // Predicated region
    $region46: #{stgnn_forward.1} parent=1 // pred_check
      _
    $region47: #{stgnn_forward.1} parent=1 // pred_check_branch
      %50 = sbr.rel (0) target = $region49
    $region48: #{stgnn_forward.1} parent=1 // pred_region
      _
    $region49: #{stgnn_forward.1} parent=1 // pred_fallthru
      _
    // Predicated region
    $region50: #{stgnn_forward.1} parent=1 // pred_check
      _
    $region51: #{stgnn_forward.1} parent=1 // pred_check_branch
      %52 = sbr.rel (0) target = $region53
    $region52: #{stgnn_forward.1} parent=1 // pred_region
      _
    $region53: #{stgnn_forward.1} parent=1 // pred_fallthru
      _
    // Predicated region
    $region54: #{stgnn_forward.1} parent=1 // pred_check
      _
    $region55: #{stgnn_forward.1} parent=1 // pred_check_branch
      %54 = sbr.rel (0) target = $region57
    $region56: #{stgnn_forward.1} parent=1 // pred_region
      _
    $region57: #{stgnn_forward.1} parent=1 // pred_fallthru
      _
    // Predicated region
    $region58: #{stgnn_forward.1} parent=1 // pred_check
      _
    $region59: #{stgnn_forward.1} parent=1 // pred_check_branch
      %56 = sbr.rel (0) target = $region61
    $region60: #{stgnn_forward.1} parent=1 // pred_region
      _
    $region61: #{stgnn_forward.1} parent=1 // pred_fallthru
      _
    %v58 = vld [vmem:[%s0] sm:$0xff]
    %v59 = vld [vmem:[%s0 + $0x8] sm:$0xff]
    %v60 = vld [vmem:[%s1] sm:$0xff]
    %v61 = vld [vmem:[%s1 + $0x8] sm:$0xff]
    %v62 = vld [vmem:[%s1 + $0x10] sm:$0xff]
    %v63 = vld [vmem:[%s1 + $0x18] sm:$0xff]
    %v64 = vld [vmem:[%s1 + $0x20] sm:$0xff]
    %v65 = vld [vmem:[%s1 + $0x28] sm:$0xff]
    %v66 = vld [vmem:[%s1 + $0x30] sm:$0xff]
    %v67 = vld [vmem:[%s1 + $0x38] sm:$0xff]
    %v68 = vld [vmem:[%s1 + $0x40] sm:$0x3f]
    %vm69 = vcmask 572416
    %v71 = vsel %vm69, %v58, 0
    %v74 = vsel %vm69, %v59, 0
    %vm76 = vcmask 1045504
    %v78 = vsel %vm76, %v68, 0
    %80 = vmatpush.msra.mxu0 0.0
    %81 = vmatpush.msra.mxu0 0.0
    %82 = vmatpush.msra.mxu0 0.0
    %83 = vmatpush.msra.mxu0 0.0
    %84 = vmatpush.msra.mxu0 0.0
    %85 = vmatpush.msra.mxu0 0.0
    %86 = vmatpush.msra.mxu0 0.0
    %87 = vmatpush.msra.mxu0 %v78
    %88 = vmatpush.msra.mxu0 %v67
    %89 = vmatpush.msra.mxu0 %v66
    %90 = vmatpush.msra.mxu0 %v65
    %91 = vmatpush.msra.mxu0 %v64
    %92 = vmatpush.msra.mxu0 %v63
    %93 = vmatpush.msra.mxu0 %v62
    %94 = vmatpush.msra.mxu0 %v61
    %95 = vmatpush.msra.mxu0 %v60
    %96 = vmatmul.f32.gmra.mxu0 %v71
    %v97 = vpop.f32.mrf.mxu0
    %v98 = vadd.f32 0.0, %v97
    %99 = vmatmul.f32.gmra.mxu0 %v74
    %v100 = vpop.f32.mrf.mxu0
    %v101 = vadd.f32 0.0, %v100
    %102 = vdwg.mxu0
    %v103 = vld [vmem:[%s2] sm:$0xff]
    %v104 = vld [vmem:[%s2 + $0x8] sm:$0xff]
    %v105 = vld [vmem:[%s2 + $0x10] sm:$0xff]
    %v106 = vld [vmem:[%s2 + $0x18] sm:$0xff]
    %v107 = vld [vmem:[%s2 + $0x20] sm:$0xff]
    %v108 = vld [vmem:[%s2 + $0x28] sm:$0xff]
    %v109 = vld [vmem:[%s2 + $0x30] sm:$0xff]
    %v110 = vld [vmem:[%s2 + $0x38] sm:$0xff]
    %vm111 = vcmask 523264
    %v113 = vsel %vm111, %v98, 0
    %v116 = vsel %vm111, %v101, 0
    %118 = vmatpush.msra.mxu0 0.0
    %119 = vmatpush.msra.mxu0 0.0
    %120 = vmatpush.msra.mxu0 0.0
    %121 = vmatpush.msra.mxu0 0.0
    %122 = vmatpush.msra.mxu0 0.0
    %123 = vmatpush.msra.mxu0 0.0
    %124 = vmatpush.msra.mxu0 0.0
    %125 = vmatpush.msra.mxu0 0.0
    %126 = vmatpush.msra.mxu0 %v110
    %127 = vmatpush.msra.mxu0 %v109
    %128 = vmatpush.msra.mxu0 %v108
    %129 = vmatpush.msra.mxu0 %v107
    %130 = vmatpush.msra.mxu0 %v106
    %131 = vmatpush.msra.mxu0 %v105
    %132 = vmatpush.msra.mxu0 %v104
    %133 = vmatpush.msra.mxu0 %v103
    %134 = vmatmul.f32.gmra.mxu0 %v113
    %v135 = vpop.f32.mrf.mxu0
    %v136 = vadd.f32 0.0, %v135
    %137 = vmatmul.f32.gmra.mxu0 %v116
    %v138 = vpop.f32.mrf.mxu0
    %v139 = vadd.f32 0.0, %v138
    %140 = vdwg.mxu0
    %v141 = vld [vmem:[%s3] sm:$0xff]
    %v142 = vld [vmem:[%s3 + $0x8] sm:$0xff]
    %v143 = vld [vmem:[%s3 + $0x10] sm:$0xff]
    %v144 = vld [vmem:[%s3 + $0x18] sm:$0xff]
    %v145 = vld [vmem:[%s3 + $0x20] sm:$0xff]
    %v146 = vld [vmem:[%s3 + $0x28] sm:$0xff]
    %v147 = vld [vmem:[%s3 + $0x30] sm:$0xff]
    %v148 = vld [vmem:[%s3 + $0x38] sm:$0xff]
    %149 = vmatpush.msra.mxu0 0.0
    %150 = vmatpush.msra.mxu0 0.0
    %151 = vmatpush.msra.mxu0 0.0
    %152 = vmatpush.msra.mxu0 0.0
    %153 = vmatpush.msra.mxu0 0.0
    %154 = vmatpush.msra.mxu0 0.0
    %155 = vmatpush.msra.mxu0 0.0
    %156 = vmatpush.msra.mxu0 0.0
    %157 = vmatpush.msra.mxu0 %v148
    %158 = vmatpush.msra.mxu0 %v147
    %159 = vmatpush.msra.mxu0 %v146
    %160 = vmatpush.msra.mxu0 %v145
    %161 = vmatpush.msra.mxu0 %v144
    %162 = vmatpush.msra.mxu0 %v143
    %163 = vmatpush.msra.mxu0 %v142
    %164 = vmatpush.msra.mxu0 %v141
    %165 = vmatmul.f32.gmra.mxu0 %v113
    %v166 = vpop.f32.mrf.mxu0
    %v167 = vadd.f32 0.0, %v166
    %168 = vmatmul.f32.gmra.mxu0 %v116
    %v169 = vpop.f32.mrf.mxu0
    %v170 = vadd.f32 0.0, %v169
    %171 = vdwg.mxu0
    %v172 = vld [vmem:[%s4] sm:$0xf]
    %v173 = vld [vmem:[%s4 + $0x4] sm:$0xf]
    %v174 = vld [vmem:[%s4 + $0x8] sm:$0xf]
    %v175 = vld [vmem:[%s4 + $0xc] sm:$0xf]
    %v176 = vld [vmem:[%s4 + $0x10] sm:$0xf]
    %v177 = vld [vmem:[%s4 + $0x14] sm:$0xf]
    %v178 = vld [vmem:[%s5] sm:$0xf]
    %v179 = vld [vmem:[%s5 + $0x4] sm:$0xf]
    %v180 = vld [vmem:[%s5 + $0x8] sm:$0xf]
    %v181 = vld [vmem:[%s5 + $0xc] sm:$0xf]
    %v182 = vld [vmem:[%s5 + $0x10] sm:$0xf]
    %v183 = vld [vmem:[%s5 + $0x14] sm:$0xf]
    %v184 = vpack.c.bf16 %v101, %v98
    %v191 = vunpack.c.l.b16 %v172
    %v192 = vunpack.c.l.b16 %v173
    %v193 = vunpack.c.l.b16 %v174
    %v194 = vunpack.c.l.b16 %v175
    %v195 = vunpack.c.l.b16 %v176
    %v196 = vunpack.c.l.b16 %v177
    %v197 = vpack.c.b16 %v192, %v191
    %v198 = vpack.c.b16 %v194, %v193
    %v199 = vpack.c.b16 %v196, %v195
    %vm200 = vcmask 130048
    %v202 = vsel %vm200, %v197, 0
    %v205 = vsel %vm200, %v198, 0
    %v208 = vsel %vm200, %v199, 0
    %210 = vmatpush.bf16.msra.mxu0 0
    %211 = vmatpush.bf16.msra.mxu0 0
    %212 = vmatpush.bf16.msra.mxu0 0
    %213 = vmatpush.bf16.msra.mxu0 0
    %214 = vmatpush.bf16.msra.mxu0 0
    %215 = vmatpush.bf16.msra.mxu0 0
    %216 = vmatpush.bf16.msra.mxu0 0
    %217 = vmatpush.bf16.msra.mxu0 %v184
    %218 = vmatmul.bf16.gmra.mxu0 %v202
    %v219 = vpop.f32.mrf.mxu0
    %v220 = vadd.f32 0.0, %v219
    %v221 = vpop.f32.mrf.mxu0
    %v222 = vadd.f32 0.0, %v221
    %223 = vmatmul.bf16.gmra.mxu0 %v205
    %v224 = vpop.f32.mrf.mxu0
    %v225 = vadd.f32 0.0, %v224
    %v226 = vpop.f32.mrf.mxu0
    %v227 = vadd.f32 0.0, %v226
    %228 = vmatmul.bf16.gmra.mxu0 %v208
    %v229 = vpop.f32.mrf.mxu0
    %v230 = vadd.f32 0.0, %v229
    %v231 = vpop.f32.mrf.mxu0
    %v232 = vadd.f32 0.0, %v231
    %233 = vdwg.mxu0
    %v234 = vpack.c.bf16 %v139, %v136
    %v235 = vpack.c.bf16 %v170, %v167
    %v242 = vunpack.c.l.b16 %v178
    %v243 = vunpack.c.l.b16 %v179
    %v244 = vunpack.c.l.b16 %v180
    %v245 = vunpack.c.l.b16 %v181
    %v246 = vunpack.c.l.b16 %v182
    %v247 = vunpack.c.l.b16 %v183
    %v248 = vpack.c.b16 %v243, %v242
    %v249 = vpack.c.b16 %v245, %v244
    %v250 = vpack.c.b16 %v247, %v246
    %v252 = vsel %vm200, %v248, 0
    %v255 = vsel %vm200, %v249, 0
    %v258 = vsel %vm200, %v250, 0
    %260 = vmatpush.bf16.msra.mxu0 0
    %261 = vmatpush.bf16.msra.mxu0 0
    %262 = vmatpush.bf16.msra.mxu0 0
    %263 = vmatpush.bf16.msra.mxu0 0
    %264 = vmatpush.bf16.msra.mxu0 0
    %265 = vmatpush.bf16.msra.mxu0 0
    %266 = vmatpush.bf16.msra.mxu0 0
    %267 = vmatpush.bf16.msra.mxu0 %v235
    %268 = vmatmul.bf16.gmra.mxu0 %v252
    %v269 = vpop.f32.mrf.mxu0
    %v270 = vadd.f32 0.0, %v269
    %v271 = vpop.f32.mrf.mxu0
    %v272 = vadd.f32 0.0, %v271
    %273 = vmatmul.bf16.gmra.mxu0 %v255
    %v274 = vpop.f32.mrf.mxu0
    %v275 = vadd.f32 0.0, %v274
    %v276 = vpop.f32.mrf.mxu0
    %v277 = vadd.f32 0.0, %v276
    %278 = vmatmul.bf16.gmra.mxu0 %v258
    %v279 = vpop.f32.mrf.mxu0
    %v280 = vadd.f32 0.0, %v279
    %v281 = vpop.f32.mrf.mxu0
    %v282 = vadd.f32 0.0, %v281
    %283 = vdwg.mxu0
    %284 = vmatpush.bf16.msra.mxu0 0
    %285 = vmatpush.bf16.msra.mxu0 0
    %286 = vmatpush.bf16.msra.mxu0 0
    %287 = vmatpush.bf16.msra.mxu0 0
    %288 = vmatpush.bf16.msra.mxu0 0
    %289 = vmatpush.bf16.msra.mxu0 0
    %290 = vmatpush.bf16.msra.mxu0 0
    %291 = vmatpush.bf16.msra.mxu0 %v234
    %292 = vmatmul.bf16.gmra.mxu0 %v202
    %v293 = vpop.f32.mrf.mxu0
    %v294 = vadd.f32 %v270, %v293
    %v295 = vpop.f32.mrf.mxu0
    %v296 = vadd.f32 %v272, %v295
    %297 = vmatmul.bf16.gmra.mxu0 %v205
    %v298 = vpop.f32.mrf.mxu0
    %v299 = vadd.f32 %v275, %v298
    %v300 = vpop.f32.mrf.mxu0
    %v301 = vadd.f32 %v277, %v300
    %302 = vmatmul.bf16.gmra.mxu0 %v208
    %v303 = vpop.f32.mrf.mxu0
    %v304 = vadd.f32 %v280, %v303
    %v305 = vpop.f32.mrf.mxu0
    %v306 = vadd.f32 %v282, %v305
    %307 = vdwg.mxu0
    %vm308 = vcmp.ge.f32.partialorder %v294, 0.0
    %vm309 = vcmp.ge.f32.partialorder %v296, 0.0
    %vm310 = vcmp.ge.f32.partialorder %v299, 0.0
    %vm311 = vcmp.ge.f32.partialorder %v301, 0.0
    %vm312 = vcmp.ge.f32.partialorder %v304, 0.0
    %vm313 = vcmp.ge.f32.partialorder %v306, 0.0
    %v314 = vmul.f32 %v294, 0.2
    %v315 = vmul.f32 %v296, 0.2
    %v316 = vmul.f32 %v299, 0.2
    %v317 = vmul.f32 %v301, 0.2
    %v318 = vmul.f32 %v304, 0.2
    %v319 = vmul.f32 %v306, 0.2
    %v320 = vsel %vm308, %v294, %v314
    %v321 = vsel %vm309, %v296, %v315
    %v322 = vsel %vm310, %v299, %v316
    %v323 = vsel %vm311, %v301, %v317
    %v324 = vsel %vm312, %v304, %v318
    %v325 = vsel %vm313, %v306, %v319
    %vm326 = vcmask 31744
    %v327 = vsel %vm326, %v320, -inf
    %v328 = vsel %vm326, %v321, -inf
    %v329 = vsel %vm326, %v322, -inf
    %v330 = vsel %vm326, %v323, -inf
    %v331 = vsel %vm326, %v324, -inf
    %v332 = vmax.f32 %v327, %v331
    %v333 = vsel %vm326, %v325, -inf
    %v334 = vmax.f32 %v328, %v333
    %v335 = vmax.f32 %v332, %v334
    %v336 = vmax.f32 %v329, %v330
    %v337 = vmax.f32 %v335, %v336
    %v338 = vrot.slane %v337, 4
    %v339 = vmax.f32 %v337, %v338
    %v340 = vrot.slane %v339, 2
    %v341 = vmax.f32 %v339, %v340
    %v342 = vrot.slane %v341, 1
    %v343 = vmax.f32 %v341, %v342
    %v344 = vsub.f32 %v320, %v343
    %v345 = vsub.f32 %v321, %v343
    %v346 = vsub.f32 %v322, %v343
    %v347 = vsub.f32 %v323, %v343
    %v348 = vsub.f32 %v324, %v343
    %v349 = vsub.f32 %v325, %v343
    %v350 = vmul.f32 %v344, 1.442695
    %v351 = vpow.pop %v350
    %v352 = vmul.f32 %v345, 1.442695
    %v353 = vpow.pop %v352
    %v354 = vmul.f32 %v346, 1.442695
    %v355 = vpow.pop %v354
    %v356 = vmul.f32 %v347, 1.442695
    %v357 = vpow.pop %v356
    %v358 = vmul.f32 %v348, 1.442695
    %v359 = vpow.pop %v358
    %v360 = vmul.f32 %v349, 1.442695
    %v361 = vpow.pop %v360
    %v362 = vsel %vm326, %v351, 0.0
    %v363 = vsel %vm326, %v353, 0.0
    %v364 = vadd.f32 %v362, %v363
    %v365 = vsel %vm326, %v355, 0.0
    %v366 = vadd.f32 %v364, %v365
    %v367 = vsel %vm326, %v357, 0.0
    %v368 = vadd.f32 %v366, %v367
    %v369 = vsel %vm326, %v359, 0.0
    %v370 = vadd.f32 %v368, %v369
    %v371 = vsel %vm326, %v361, 0.0
    %v372 = vadd.f32 %v370, %v371
    %v373 = vrot.slane %v372, 4
    %v374 = vadd.f32 %v372, %v373
    %v375 = vrot.slane %v374, 2
    %v376 = vadd.f32 %v374, %v375
    %v377 = vrot.slane %v376, 1
    %v378 = vadd.f32 %v376, %v377
    %v379 = vrcp.pop %v378
    %v380 = vmul.f32 %v351, %v379
    %v381 = vmul.f32 %v353, %v379
    %v382 = vmul.f32 %v355, %v379
    %v383 = vmul.f32 %v357, %v379
    %v384 = vmul.f32 %v359, %v379
    %v385 = vmul.f32 %v361, %v379
    %v386 = vld [vmem:[%s6] sm:$0xf]
    %v388 = vsel %vm326, %v380, 0
    %v391 = vsel %vm326, %v381, 0
    %v394 = vsel %vm326, %v382, 0
    %v397 = vsel %vm326, %v383, 0
    %v400 = vsel %vm326, %v384, 0
    %v403 = vsel %vm326, %v385, 0
    %vm405 = vcmask 1043456
    %v407 = vsel %vm405, %v386, 0
    %409 = vmatpush.msra.mxu0 0.0
    %410 = vmatpush.msra.mxu0 0.0
    %411 = vmatpush.msra.mxu0 0.0
    %412 = vmatpush.msra.mxu0 0.0
    %413 = vmatpush.msra.mxu0 0.0
    %414 = vmatpush.msra.mxu0 0.0
    %415 = vmatpush.msra.mxu0 0.0
    %416 = vmatpush.msra.mxu0 0.0
    %417 = vmatpush.msra.mxu0 0.0
    %418 = vmatpush.msra.mxu0 0.0
    %419 = vmatpush.msra.mxu0 0.0
    %420 = vmatpush.msra.mxu0 0.0
    %421 = vmatpush.msra.mxu0 0.0
    %422 = vmatpush.msra.mxu0 0.0
    %423 = vmatpush.msra.mxu0 0.0
    %424 = vmatpush.msra.mxu0 %v407
    %425 = vmatmul.f32.gmra.mxu0 %v388
    %v426 = vpop.f32.mrf.mxu0
    %v427 = vadd.f32 0.0, %v426
    %428 = vmatmul.f32.gmra.mxu0 %v391
    %v429 = vpop.f32.mrf.mxu0
    %v430 = vadd.f32 0.0, %v429
    %431 = vmatmul.f32.gmra.mxu0 %v394
    %v432 = vpop.f32.mrf.mxu0
    %v433 = vadd.f32 0.0, %v432
    %434 = vmatmul.f32.gmra.mxu0 %v397
    %v435 = vpop.f32.mrf.mxu0
    %v436 = vadd.f32 0.0, %v435
    %437 = vmatmul.f32.gmra.mxu0 %v400
    %v438 = vpop.f32.mrf.mxu0
    %v439 = vadd.f32 0.0, %v438
    %440 = vmatmul.f32.gmra.mxu0 %v403
    %v441 = vpop.f32.mrf.mxu0
    %v442 = vadd.f32 0.0, %v441
    %443 = vdwg.mxu0
    %v444 = vmul.f32 %v220, %v427
    %v445 = vmul.f32 %v222, %v430
    %v446 = vmul.f32 %v225, %v433
    %v447 = vmul.f32 %v227, %v436
    %v448 = vmul.f32 %v230, %v439
    %v449 = vmul.f32 %v232, %v442
    %v450 = vpack.c.bf16 %v445, %v444
    %v451 = vpack.c.bf16 %v447, %v446
    %v452 = vpack.c.bf16 %v449, %v448
    %456 = vxpose.xlu0.c.b16.start [1/8] %v248, 128
    %457 = vxpose.xlu0.c.b16.cont [2/8] %v249, 128
    %458 = vxpose.xlu0.c.b16.cont [3/8] %v250, 128
    %459 = vxpose.xlu0.c.b16.cont [4/8] 0, 128
    %460 = vxpose.xlu0.c.b16.cont [5/8] 0, 128
    %461 = vxpose.xlu0.c.b16.cont [6/8] 0, 128
    %462 = vxpose.xlu0.c.b16.cont [7/8] 0, 128
    %463 = vxpose.xlu0.c.b16.end [8/8] 0, 128
    %v464 = vpop.trf.xlu0
    %v465 = vpop.trf.xlu0
    %v466 = vpop.trf.xlu0
    %v467 = vpop.trf.xlu0
    %v468 = vpop.trf.xlu0
    %v469 = vpop.trf.xlu0
    %v470 = vpop.trf.xlu0
    %v471 = vpop.trf.xlu0
    %vm472 = vcmask 392192
    %v474 = vsel %vm472, %v464, 0
    %476 = vmatpush.bf16.msra.mxu0 0
    %477 = vmatpush.bf16.msra.mxu0 0
    %478 = vmatpush.bf16.msra.mxu0 0
    %479 = vmatpush.bf16.msra.mxu0 0
    %480 = vmatpush.bf16.msra.mxu0 0
    %481 = vmatpush.bf16.msra.mxu0 %v452
    %482 = vmatpush.bf16.msra.mxu0 %v451
    %483 = vmatpush.bf16.msra.mxu0 %v450
    %484 = vmatmul.bf16.gmra.mxu0 %v474
    %v485 = vpop.f32.mrf.mxu0
    %v486 = vadd.f32 0.0, %v485
    %v487 = vpop.f32.mrf.mxu0
    %v488 = vadd.f32 0.0, %v487
    %489 = vdwg.mxu0
    %490 = vst.msk [vmem:[#allocation4] sm:$0xff] %vm111, %v486
    %491 = vst.msk [vmem:[#allocation4 + $0x8] sm:$0xff] %vm111, %v488
    %v492 = vld [vmem:[%s7] sm:$0xff]
    %v493 = vld [vmem:[%s7 + $0x8] sm:$0xff]
    %v494 = vld [vmem:[%s8] sm:$0xff]
    %v495 = vld [vmem:[%s8 + $0x8] sm:$0xff]
    %v496 = vld [vmem:[%s8 + $0x10] sm:$0xff]
    %v497 = vld [vmem:[%s8 + $0x18] sm:$0xff]
    %v498 = vld [vmem:[%s8 + $0x20] sm:$0xff]
    %v499 = vld [vmem:[%s8 + $0x28] sm:$0xff]
    %v500 = vld [vmem:[%s8 + $0x30] sm:$0xff]
    %v501 = vld [vmem:[%s8 + $0x38] sm:$0xff]
    %v502 = vld [vmem:[%s8 + $0x40] sm:$0xff]
    %v503 = vld [vmem:[%s9] sm:$0x1]
    %v505 = vperm.slane %v503, 0
    %vm507 = vcmask 588800
    %v509 = vsel %vm507, %v492, 0
    %v512 = vsel %vm507, %v493, 0
    %514 = vmatpush.msra.mxu0 0.0
    %515 = vmatpush.msra.mxu0 0.0
    %516 = vmatpush.msra.mxu0 0.0
    %517 = vmatpush.msra.mxu0 0.0
    %518 = vmatpush.msra.mxu0 0.0
    %519 = vmatpush.msra.mxu0 0.0
    %520 = vmatpush.msra.mxu0 0.0
    %521 = vmatpush.msra.mxu0 %v502
    %522 = vmatpush.msra.mxu0 %v501
    %523 = vmatpush.msra.mxu0 %v500
    %524 = vmatpush.msra.mxu0 %v499
    %525 = vmatpush.msra.mxu0 %v498
    %526 = vmatpush.msra.mxu0 %v497
    %527 = vmatpush.msra.mxu0 %v496
    %528 = vmatpush.msra.mxu0 %v495
    %529 = vmatpush.msra.mxu0 %v494
    %530 = vmatmul.f32.gmra.mxu0 %v509
    %v531 = vpop.f32.mrf.mxu0
    %v532 = vadd.f32 %v505, %v531
    %533 = vmatmul.f32.gmra.mxu0 %v512
    %v534 = vpop.f32.mrf.mxu0
    %v535 = vadd.f32 %v505, %v534
    %536 = vdwg.mxu0
    %vm537 = vcmp.ge.f32.partialorder %v532, 0.0
    %vm538 = vcmp.ge.f32.partialorder %v535, 0.0
    %v539 = vmul.f32 %v532, 0.2
    %v540 = vmul.f32 %v535, 0.2
    %v541 = vsel %vm537, %v532, %v539
    %v542 = vsel %vm538, %v535, %v540
    %v543 = vld [vmem:[%s10] sm:$0xff]
    %v544 = vld [vmem:[%s10 + $0x8] sm:$0xff]
    %v545 = vld [vmem:[%s10 + $0x10] sm:$0xff]
    %v546 = vld [vmem:[%s10 + $0x18] sm:$0xff]
    %v547 = vld [vmem:[%s10 + $0x20] sm:$0xff]
    %v548 = vld [vmem:[%s10 + $0x28] sm:$0xff]
    %v549 = vld [vmem:[%s10 + $0x30] sm:$0xff]
    %v550 = vld [vmem:[%s10 + $0x38] sm:$0xff]
    %v551 = vld [vmem:[%s11] sm:$0xff]
    %v552 = vld [vmem:[%s11 + $0x8] sm:$0xff]
    %v553 = vld [vmem:[%s11 + $0x10] sm:$0xff]
    %v554 = vld [vmem:[%s11 + $0x18] sm:$0xff]
    %v555 = vld [vmem:[%s11 + $0x20] sm:$0xff]
    %v556 = vld [vmem:[%s11 + $0x28] sm:$0xff]
    %v557 = vld [vmem:[%s11 + $0x30] sm:$0xff]
    %v558 = vld [vmem:[%s11 + $0x38] sm:$0xff]
    %v560 = vsel %vm111, %v541, 0
    %v563 = vsel %vm111, %v542, 0
    %565 = vmatpush.msra.mxu0 0.0
    %566 = vmatpush.msra.mxu0 0.0
    %567 = vmatpush.msra.mxu0 0.0
    %568 = vmatpush.msra.mxu0 0.0
    %569 = vmatpush.msra.mxu0 0.0
    %570 = vmatpush.msra.mxu0 0.0
    %571 = vmatpush.msra.mxu0 0.0
    %572 = vmatpush.msra.mxu0 0.0
    %573 = vmatpush.msra.mxu0 %v558
    %574 = vmatpush.msra.mxu0 %v557
    %575 = vmatpush.msra.mxu0 %v556
    %576 = vmatpush.msra.mxu0 %v555
    %577 = vmatpush.msra.mxu0 %v554
    %578 = vmatpush.msra.mxu0 %v553
    %579 = vmatpush.msra.mxu0 %v552
    %580 = vmatpush.msra.mxu0 %v551
    %581 = vmatmul.f32.gmra.mxu0 %v560
    %v582 = vpop.f32.mrf.mxu0
    %v583 = vadd.f32 0.0, %v582
    %584 = vmatmul.f32.gmra.mxu0 %v563
    %v585 = vpop.f32.mrf.mxu0
    %v586 = vadd.f32 0.0, %v585
    %587 = vdwg.mxu0
    %v589 = vsel %vm111, %v486, 0
    %v592 = vsel %vm111, %v488, 0
    %594 = vmatpush.msra.mxu0 0.0
    %595 = vmatpush.msra.mxu0 0.0
    %596 = vmatpush.msra.mxu0 0.0
    %597 = vmatpush.msra.mxu0 0.0
    %598 = vmatpush.msra.mxu0 0.0
    %599 = vmatpush.msra.mxu0 0.0
    %600 = vmatpush.msra.mxu0 0.0
    %601 = vmatpush.msra.mxu0 0.0
    %602 = vmatpush.msra.mxu0 %v550
    %603 = vmatpush.msra.mxu0 %v549
    %604 = vmatpush.msra.mxu0 %v548
    %605 = vmatpush.msra.mxu0 %v547
    %606 = vmatpush.msra.mxu0 %v546
    %607 = vmatpush.msra.mxu0 %v545
    %608 = vmatpush.msra.mxu0 %v544
    %609 = vmatpush.msra.mxu0 %v543
    %610 = vmatmul.f32.gmra.mxu0 %v589
    %v611 = vpop.f32.mrf.mxu0
    %v612 = vadd.f32 %v583, %v611
    %613 = vmatmul.f32.gmra.mxu0 %v592
    %v614 = vpop.f32.mrf.mxu0
    %v615 = vadd.f32 %v586, %v614
    %616 = vdwg.mxu0
    %v617 = vld [vmem:[#allocation2] sm:$0x1]
    %v619 = vperm.slane %v617, 0
    %v621 = vadd.f32 %v612, %v619
    %v622 = vadd.f32 %v615, %v619
    %v623 = vsub.f32 0.0, %v621
    %v624 = vsub.f32 0.0, %v622
    %v625 = vmul.f32 %v623, 1.442695
    %v626 = vpow.pop %v625
    %v627 = vmul.f32 %v624, 1.442695
    %v628 = vpow.pop %v627
    %v629 = vadd.f32 %v626, 1.0
    %v630 = vadd.f32 %v628, 1.0
    %v631 = vrcp.pop %v629
    %v632 = vmul.f32 %v629, %v631
    %v633 = vsub.f32 1.0, %v632
    %v634 = vmul.f32 %v631, %v633
    %v635 = vadd.f32 %v631, %v634
    %vm636 = vweird.f32 %v629
    %vm637 = vweird.f32 %v631
    %vm638 = vmor %vm636, %vm637
    %v639 = vsel %vm638, %v631, %v635
    %v640 = vand.u32 2147483647, %v629
    %vm641 = vcmp.eq.f32.partialorder %v640, 8.507059e+37
    %v642 = vand.u32 %v629, 2147483648
    %v643 = vor.u32 1.1754944e-38, %v642
    %v644 = vsel %vm641, %v643, %v639
    %v645 = vmul.f32 1.0, %v644
    %v646 = vrcp.pop %v630
    %v647 = vmul.f32 %v630, %v646
    %v648 = vsub.f32 1.0, %v647
    %v649 = vmul.f32 %v646, %v648
    %v650 = vadd.f32 %v646, %v649
    %vm651 = vweird.f32 %v630
    %vm652 = vweird.f32 %v646
    %vm653 = vmor %vm651, %vm652
    %v654 = vsel %vm653, %v646, %v650
    %v655 = vand.u32 2147483647, %v630
    %vm656 = vcmp.eq.f32.partialorder %v655, 8.507059e+37
    %v657 = vand.u32 %v630, 2147483648
    %v658 = vor.u32 1.1754944e-38, %v657
    %v659 = vsel %vm656, %v658, %v654
    %v660 = vmul.f32 1.0, %v659
    %662 = vset.pattern.permute.xlu0 0
    %663 = vperm.xlu0 %662, %v645
    %v664 = vpop.permute.xlu0 %663
    %667 = vset.pattern.permute.xlu0 0
    %668 = vperm.xlu0 %667, %v660
    %v669 = vpop.permute.xlu0 %668
    %v671 = vmul.f32 %v664, %v486
    %v672 = vmul.f32 %v669, %v488
    %v673 = vsub.f32 1.0, %v645
    %v674 = vsub.f32 1.0, %v660
    %676 = vset.pattern.permute.xlu0 0
    %677 = vperm.xlu0 %676, %v673
    %v678 = vpop.permute.xlu0 %677
    %681 = vset.pattern.permute.xlu0 0
    %682 = vperm.xlu0 %681, %v674
    %v683 = vpop.permute.xlu0 %682
    %v685 = vmul.f32 %v678, %v541
    %v686 = vmul.f32 %v683, %v542
    %v687 = vadd.f32 %v671, %v685
    %v688 = vadd.f32 %v672, %v686
    %v689 = vld [vmem:[%s13] sm:$0xff]
    %v690 = vld [vmem:[%s13 + $0x8] sm:$0xff]
    %v691 = vld [vmem:[%s13 + $0x10] sm:$0xff]
    %v692 = vld [vmem:[%s13 + $0x18] sm:$0xff]
    %v693 = vld [vmem:[%s13 + $0x20] sm:$0xff]
    %v694 = vld [vmem:[%s13 + $0x28] sm:$0xff]
    %v695 = vld [vmem:[%s13 + $0x30] sm:$0xff]
    %v696 = vld [vmem:[%s13 + $0x38] sm:$0xff]
    %v697 = vld [vmem:[#allocation3] sm:$0x1]
    %v699 = vperm.slane %v697, 0
    %v702 = vsel %vm111, %v687, 0
    %v705 = vsel %vm111, %v688, 0
    %707 = vmatpush.msra.mxu0 0.0
    %708 = vmatpush.msra.mxu0 0.0
    %709 = vmatpush.msra.mxu0 0.0
    %710 = vmatpush.msra.mxu0 0.0
    %711 = vmatpush.msra.mxu0 0.0
    %712 = vmatpush.msra.mxu0 0.0
    %713 = vmatpush.msra.mxu0 0.0
    %714 = vmatpush.msra.mxu0 0.0
    %715 = vmatpush.msra.mxu0 %v696
    %716 = vmatpush.msra.mxu0 %v695
    %717 = vmatpush.msra.mxu0 %v694
    %718 = vmatpush.msra.mxu0 %v693
    %719 = vmatpush.msra.mxu0 %v692
    %720 = vmatpush.msra.mxu0 %v691
    %721 = vmatpush.msra.mxu0 %v690
    %722 = vmatpush.msra.mxu0 %v689
    %723 = vmatmul.f32.gmra.mxu0 %v702
    %v724 = vpop.f32.mrf.mxu0
    %v725 = vadd.f32 %v699, %v724
    %726 = vmatmul.f32.gmra.mxu0 %v705
    %v727 = vpop.f32.mrf.mxu0
    %v728 = vadd.f32 %v699, %v727
    %729 = vdwg.mxu0
    %v730 = vsub.f32 0.0, %v725
    %v731 = vsub.f32 0.0, %v728
    %v732 = vmul.f32 %v730, 1.442695
    %v733 = vpow.pop %v732
    %v734 = vmul.f32 %v731, 1.442695
    %v735 = vpow.pop %v734
    %v736 = vadd.f32 %v733, 1.0
    %v737 = vadd.f32 %v735, 1.0
    %v738 = vrcp.pop %v736
    %v739 = vmul.f32 %v736, %v738
    %v740 = vsub.f32 1.0, %v739
    %v741 = vmul.f32 %v738, %v740
    %v742 = vadd.f32 %v738, %v741
    %vm743 = vweird.f32 %v736
    %vm744 = vweird.f32 %v738
    %vm745 = vmor %vm743, %vm744
    %v746 = vsel %vm745, %v738, %v742
    %v747 = vand.u32 2147483647, %v736
    %vm748 = vcmp.eq.f32.partialorder %v747, 8.507059e+37
    %v749 = vand.u32 %v736, 2147483648
    %v750 = vor.u32 1.1754944e-38, %v749
    %v751 = vsel %vm748, %v750, %v746
    %v752 = vmul.f32 1.0, %v751
    %v753 = vrcp.pop %v737
    %v754 = vmul.f32 %v737, %v753
    %v755 = vsub.f32 1.0, %v754
    %v756 = vmul.f32 %v753, %v755
    %v757 = vadd.f32 %v753, %v756
    %vm758 = vweird.f32 %v737
    %vm759 = vweird.f32 %v753
    %vm760 = vmor %vm758, %vm759
    %v761 = vsel %vm760, %v753, %v757
    %v762 = vand.u32 2147483647, %v737
    %vm763 = vcmp.eq.f32.partialorder %v762, 8.507059e+37
    %v764 = vand.u32 %v737, 2147483648
    %v765 = vor.u32 1.1754944e-38, %v764
    %v766 = vsel %vm763, %v765, %v761
    %v767 = vmul.f32 1.0, %v766
    %vm768 = vcmask 7168
    %769 = vst.msk [vmem:[%s16] sm:$0xff] %vm768, %v752
    %770 = vst.msk [vmem:[%s16 + $0x8] sm:$0xff] %vm768, %v767
    // Predicated region
    $region62: #{stgnn_forward.1} parent=1 // pred_check
      _
    $region63: #{stgnn_forward.1} parent=1 // pred_check_branch
      %772 = sbr.rel (0) target = $region65
    $region64: #{stgnn_forward.1} parent=1 // pred_region
      %774 = vsyncadd [#allocation5], 0
      %s775 = sshll.u32 [#allocation4], 4
      %s776 = int_to_ptr.vmem [resolvable:$true] %s775
      %s777 = sshll.u32 %s15, 4
      %s778 = int_to_ptr.hbm [resolvable:$true] %s777
      %783 = dma.vmem_to_hbm [thread:$0]  %s776, 256, %s778, [#allocation5], 128, 128, 8
    $region65: #{stgnn_forward.1} parent=1 // pred_fallthru
      _
    // Predicated region
    $region66: #{stgnn_forward.1} parent=1 // pred_check
      _
    $region67: #{stgnn_forward.1} parent=1 // pred_check_branch
      %785 = sbr.rel (0) target = $region69
    $region68: #{stgnn_forward.1} parent=1 // pred_region
      _
    $region69: #{stgnn_forward.1} parent=1 // pred_fallthru
      _
    // Predicated region
    $region70: #{stgnn_forward.1} parent=1 // pred_check
      _
    $region71: #{stgnn_forward.1} parent=1 // pred_check_branch
      %787 = sbr.rel (0) target = $region73
    $region72: #{stgnn_forward.1} parent=1 // pred_region
      %789 = dma.done [#allocation5], 256
    $region73: #{stgnn_forward.1} parent=1 // pred_fallthru
      _
    // Predicated region
    $region74: #{stgnn_forward.1} parent=1 // pred_check
      _
    $region75: #{stgnn_forward.1} parent=1 // pred_check_branch
      %791 = sbr.rel (0) target = $region77
    $region76: #{stgnn_forward.1} parent=1 // pred_region
      _
    $region77: #{stgnn_forward.1} parent=1 // pred_fallthru
      _
    %792 = vsyncpa [#allocation5], 1

</llo_original>
